<compile_context>
chip_gen: v6e
topology: v6e:2x2x1
jax: 0.10.0
libtpu: 0.0.40
codegen_flags: <defaults>
</compile_context>

<pallas_src>
import jax
import jax.numpy as jnp
from jax.experimental import pallas as pl
from jax.experimental.pallas import tpu as pltpu


def _small_rho_kernel_dout1(x_ref, w1_ref, b1_ref, w2_ref, b2_ref, o_ref):
    """fc1 -> tanhshrink -> fc2 (Dout=1 via VPU mul + lane reduce) -> hardtanh."""
    x = x_ref[...]                                                # (TB, Din)
    h = jnp.dot(x, w1_ref[...], preferred_element_type=jnp.float32) + b1_ref[...]
    h = h - jnp.tanh(h)                                           # tanhshrink
    # Dout == 1: VPU multiply + XLU lane-reduce uses otherwise-idle slots and
    # skips the MXU weight-load / drain latency of an N=1 matmul.
    y = jnp.sum(h * w2_ref[...], axis=-1, keepdims=True) + b2_ref[0, 0]
    o_ref[...] = jnp.clip(y, -1000.0, 1000.0).astype(o_ref.dtype)


def _small_rho_kernel_general(x_ref, w1_ref, b1_ref, w2_ref, b2_ref, o_ref):
    """Generic Dout > 1 fallback (both layers on the MXU), single shot."""
    x = x_ref[...]
    h = jnp.dot(x, w1_ref[...], preferred_element_type=jnp.float32) + b1_ref[...]
    h = h - jnp.tanh(h)
    y = jnp.dot(h, w2_ref[...], preferred_element_type=jnp.float32) + b2_ref[...]
    o_ref[...] = jnp.clip(y, -1000.0, 1000.0).astype(o_ref.dtype)


def small_rho_forward(x, w1, b1, w2, b2, *, batch_tile=512):
    """x:(B,Din), w1:(Din,H), b1:(H,), w2:(H,Dout), b2:(Dout,). Returns (B,Dout)."""
    B, Din = x.shape
    H = w1.shape[1]
    Dout = w2.shape[1]

    vmem = pl.BlockSpec(memory_space=pltpu.MemorySpace.VMEM)
    smem = pl.BlockSpec(memory_space=pltpu.MemorySpace.SMEM)

    cost = pl.CostEstimate(
        flops=2 * B * Din * H + 2 * B * H * Dout + 4 * B * H,
        transcendentals=B * H,
        bytes_accessed=4 * (B * Din + Din * H + H + H * Dout + Dout + B * Dout),
    )

    if Dout != 1:
        # Rarely used fallback: tiny generic single-shot version.
        return pl.pallas_call(
            _small_rho_kernel_general,
            out_shape=jax.ShapeDtypeStruct((B, Dout), jnp.float32),
            in_specs=[vmem, vmem, vmem, vmem, vmem],
            out_specs=vmem,
            cost_estimate=cost,
        )(x, w1, b1.reshape(1, H), w2, b2.reshape(1, Dout))

    w2_row = w2.reshape(1, H)      # (H,1) -> lane-dense (1,H) row for VPU path
    b1_row = b1.reshape(1, H)
    b2_scalar = b2.reshape(1, 1)   # SMEM scalar

    if B % batch_tile == 0 and B // batch_tile >= 2:
        # Realistic batch sizes: tile only the batch axis; weights (~4 KiB)
        # stay fully resident. Batch axis is parallel (megacore on v7x).
        return pl.pallas_call(
            _small_rho_kernel_dout1,
            out_shape=jax.ShapeDtypeStruct((B, 1), jnp.float32),
            grid=(B // batch_tile,),
            in_specs=[
                pl.BlockSpec((batch_tile, Din), lambda i: (i, 0)),
                pl.BlockSpec((Din, H), lambda i: (0, 0)),
                pl.BlockSpec((1, H), lambda i: (0, 0)),
                pl.BlockSpec((1, H), lambda i: (0, 0)),
                smem,
            ],
            out_specs=pl.BlockSpec((batch_tile, 1), lambda i: (i, 0)),
            compiler_params=pltpu.CompilerParams(
                dimension_semantics=("parallel",)),
            cost_estimate=cost,
        )(x, w1, b1_row, w2_row, b2_scalar)

    # Small batch: single-shot, no grid, no auto-pipeline / double buffering.
    return pl.pallas_call(
        _small_rho_kernel_dout1,
        out_shape=jax.ShapeDtypeStruct((B, 1), jnp.float32),
        in_specs=[vmem, vmem, vmem, vmem, smem],
        out_specs=vmem,
        cost_estimate=cost,
    )(x, w1, b1_row, w2_row, b2_scalar)


def small_rho_reference(x, w1, b1, w2, b2):
    h = x @ w1 + b1.reshape(1, -1)
    h = h - jnp.tanh(h)
    y = h @ w2 + b2.reshape(1, -1)
    return jnp.clip(y, -1000.0, 1000.0)


if __name__ == "__main__":
    INPUT_SIZE, HIDDEN_SIZE, OUTPUT_SIZE = 32, 32, 1

    key = jax.random.PRNGKey(0)
    kx, kw1, kb1, kw2, kb2, kx2 = jax.random.split(key, 6)

    # PyTorch nn.Linear-style init: U(-1/sqrt(fan_in), 1/sqrt(fan_in)).
    bound1 = 1.0 / (INPUT_SIZE ** 0.5)
    w1 = jax.random.uniform(kw1, (INPUT_SIZE, HIDDEN_SIZE), jnp.float32,
                            -bound1, bound1)
    b1 = jax.random.uniform(kb1, (HIDDEN_SIZE,), jnp.float32, -bound1, bound1)
    bound2 = 1.0 / (HIDDEN_SIZE ** 0.5)
    w2 = jax.random.uniform(kw2, (HIDDEN_SIZE, OUTPUT_SIZE), jnp.float32,
                            -bound2, bound2)
    b2 = jax.random.uniform(kb2, (OUTPUT_SIZE,), jnp.float32, -bound2, bound2)

    # Small batch -> single-shot (no-grid) path.
    B_small = 8
    x_small = jax.random.normal(kx, (B_small, INPUT_SIZE), dtype=jnp.float32)
    out_small = small_rho_forward(x_small, w1, b1, w2, b2)
    jax.block_until_ready(out_small)
    ref_small = small_rho_reference(x_small, w1, b1, w2, b2)
    assert out_small.shape == (B_small, OUTPUT_SIZE)
    assert jnp.allclose(out_small, ref_small, atol=1e-5, rtol=1e-5), \
        "small-batch mismatch vs reference"

    # Large batch -> batch-tiled, megacore-parallel path.
    B_big = 2048
    x_big = jax.random.normal(kx2, (B_big, INPUT_SIZE), dtype=jnp.float32)
    out_big = small_rho_forward(x_big, w1, b1, w2, b2)
    jax.block_until_ready(out_big)
    ref_big = small_rho_reference(x_big, w1, b1, w2, b2)
    assert out_big.shape == (B_big, OUTPUT_SIZE)
    assert jnp.allclose(out_big, ref_big, atol=1e-5, rtol=1e-5), \
        "large-batch mismatch vs reference"

    print("KERNEL_OK")
</pallas_src>

<mosaic_0001>
module attributes {stable_mosaic.version = 11 : i64} {
  func.func @_small_rho_kernel_dout1(%arg0: memref<8x32xf32, #tpu.memory_space<vmem>>, %arg1: memref<32x32xf32, #tpu.memory_space<vmem>>, %arg2: memref<1x32xf32, #tpu.memory_space<vmem>>, %arg3: memref<1x32xf32, #tpu.memory_space<vmem>>, %arg4: memref<1x1xf32, #tpu.memory_space<smem>>, %arg5: memref<8x1xf32, #tpu.memory_space<vmem>>) attributes {dimension_semantics = [], scalar_prefetch = 0 : i64, scratch_operands = 0 : i64, tpu.core_type = #tpu.core_type<tc>} {
    %c0 = arith.constant 0 : index
    %c0_0 = arith.constant 0 : index
    %0 = vector.load %arg0[%c0, %c0_0] : memref<8x32xf32, #tpu.memory_space<vmem>>, vector<8x32xf32>
    %c0_1 = arith.constant 0 : index
    %c0_2 = arith.constant 0 : index
    %1 = vector.load %arg1[%c0_1, %c0_2] : memref<32x32xf32, #tpu.memory_space<vmem>>, vector<32x32xf32>
    %cst = arith.constant dense<0.000000e+00> : vector<8x32xf32>
    %2 = tpu.matmul %0, %1, %cst {dimension_numbers = #tpu.dot_dimension_numbers<[1], [0], [0], [1], [0, 0, 1, 1], [], []>} : vector<8x32xf32>, vector<32x32xf32>, vector<8x32xf32> -> vector<8x32xf32>
    %c0_3 = arith.constant 0 : index
    %c0_4 = arith.constant 0 : index
    %3 = vector.load %arg2[%c0_3, %c0_4] : memref<1x32xf32, #tpu.memory_space<vmem>>, vector<1x32xf32>
    %4 = vector.broadcast %3 : vector<1x32xf32> to vector<8x32xf32>
    %5 = arith.addf %2, %4 : vector<8x32xf32>
    %6 = math.tanh %5 : vector<8x32xf32>
    %7 = arith.subf %5, %6 : vector<8x32xf32>
    %c0_5 = arith.constant 0 : index
    %c0_6 = arith.constant 0 : index
    %8 = vector.load %arg3[%c0_5, %c0_6] : memref<1x32xf32, #tpu.memory_space<vmem>>, vector<1x32xf32>
    %9 = vector.broadcast %8 : vector<1x32xf32> to vector<8x32xf32>
    %10 = arith.mulf %7, %9 : vector<8x32xf32>
    %cst_7 = arith.constant dense<0.000000e+00> : vector<8xf32>
    %11 = vector.multi_reduction <add>, %10, %cst_7 [1] : vector<8x32xf32> to vector<8xf32>
    %12 = vector.shape_cast %11 : vector<8xf32> to vector<8x1xf32>
    %c0_8 = arith.constant 0 : index
    %c0_9 = arith.constant 0 : index
    %13 = memref.load %arg4[%c0_8, %c0_9] : memref<1x1xf32, #tpu.memory_space<smem>>
    %14 = vector.broadcast %13 : f32 to vector<8x1xf32>
    %15 = arith.addf %12, %14 : vector<8x1xf32>
    %cst_10 = arith.constant -1.000000e+03 : f32
    %cst_11 = arith.constant 1.000000e+03 : f32
    %16 = vector.broadcast %cst_10 : f32 to vector<8x1xf32>
    %17 = arith.maximumf %16, %15 : vector<8x1xf32>
    %18 = vector.broadcast %cst_11 : f32 to vector<8x1xf32>
    %19 = arith.minimumf %18, %17 : vector<8x1xf32>
    %c0_12 = arith.constant 0 : index
    %c0_13 = arith.constant 0 : index
    %20 = vector.load %arg5[%c0_12, %c0_13] : memref<8x1xf32, #tpu.memory_space<vmem>>, vector<8x1xf32>
    tpu.vector_store %arg5[%c0_12, %c0_13], %19 {strides = array<i32>} : memref<8x1xf32, #tpu.memory_space<vmem>>, vector<8x1xf32>,
    return
  }
}

</mosaic_0001>

<llo_original>
// kernel: tpu_custom_call.1
$region0: #{tpu_custom_call.1}
  #allocation0 [shape = 'u32[]', space=smem, size = 0x4, offset = 0x4, fixed_abs, tag = 'smem constant byte address 0x4 - core index']
  #allocation1 [shape = 'u32[144,128]{1,0:T(1,128)}', space=vmem, size = 0x12000, scoped, tag = 'internal scratch']
  #allocation2 [shape = 'f32[1,1]{1,0:T(1,128)S(6)}', space=smem, size = 0x200, scoped, tag = 'scoped memory for tpu_custom_call.1']
  %s0 = inlined_call_operand.hbm [shape: f32[8,32], index: 0, kind: input, shape index: {}]
  %s1 = inlined_call_operand.hbm [shape: f32[32,32], index: 1, kind: input, shape index: {}]
  %s2 = inlined_call_operand.vmem [shape: f32[1,32], index: 2, kind: input, shape index: {}]
  %s3 = inlined_call_operand.vmem [shape: f32[1,32], index: 3, kind: input, shape index: {}]
  %s4 = inlined_call_operand.<no memory space> [shape: f32[1,1], index: 4, kind: input, shape index: {}]
  %s5 = inlined_call_operand.vmem [shape: f32[8,1], index: 5, kind: output, shape index: {}]
  %s6 = sld [smem:[#allocation0]]
  $region38: #{tpu_custom_call.1} parent=0
    _
  %s8 = ssub.s32 1, %s6
  %s9 = scalar_select 0, %s8, %s6
  %10 = sst [smem:[#allocation2]] %s4
  $region1: #{tpu_custom_call.1} parent=0
    #allocation3 [shape = 'u8[4096]{0}', space=vmem, size = 0x1000, scoped, tag = 'input window, operand 0, single buffered']
    #allocation4 [shape = 's32[1]{0}', space=sflag, size = 0x4, scoped, tag = 'scoped memory for tpu_custom_call.1']
    #allocation5 [shape = 'u8[16384]{0}', space=vmem, size = 0x4000, scoped, tag = 'input window, operand 1, single buffered']
    #allocation6 [shape = 's32[1]{0}', space=sflag, size = 0x4, scoped, tag = 'scoped memory for tpu_custom_call.1']
    %11 = vsyncpa [#allocation4], 0
    %12 = vsyncpa [#allocation6], 0
    // Predicated region
    $region2: #{tpu_custom_call.1} parent=1 // pred_check
      _
    $region3: #{tpu_custom_call.1} parent=1 // pred_check_branch
      %14 = sbr.rel (0) target = $region5
    $region4: #{tpu_custom_call.1} parent=1 // pred_region
      %s16 = ssub.s32 128, 128
      %17 = vsyncadd [#allocation4], %s16
      %s19 = sshll.u32 [#allocation3], 4
      %s20 = int_to_ptr.vmem [resolvable:$true] %s19
      %22 = dma.hbm_to_vmem [thread:$0]  %s0, 128, %s20, [#allocation4]
    $region5: #{tpu_custom_call.1} parent=1 // pred_fallthru
      _
    // Predicated region
    $region6: #{tpu_custom_call.1} parent=1 // pred_check
      _
    $region7: #{tpu_custom_call.1} parent=1 // pred_check_branch
      %24 = sbr.rel (0) target = $region9
    $region8: #{tpu_custom_call.1} parent=1 // pred_region
      %s26 = ssub.s32 512, 512
      %27 = vsyncadd [#allocation6], %s26
      %s28 = sshll.u32 [#allocation5], 4
      %s29 = int_to_ptr.vmem [resolvable:$true] %s28
      %34 = dma.hbm_to_vmem [thread:$0]  %s1, 512, %s29, [#allocation6], 128, 128, 8
    $region9: #{tpu_custom_call.1} parent=1 // pred_fallthru
      _
    // Predicated region
    $region10: #{tpu_custom_call.1} parent=1 // pred_check
      _
    $region11: #{tpu_custom_call.1} parent=1 // pred_check_branch
      %36 = sbr.rel (0) target = $region13
    $region12: #{tpu_custom_call.1} parent=1 // pred_region
      _
    $region13: #{tpu_custom_call.1} parent=1 // pred_fallthru
      _
    // Predicated region
    $region14: #{tpu_custom_call.1} parent=1 // pred_check
      _
    $region15: #{tpu_custom_call.1} parent=1 // pred_check_branch
      %38 = sbr.rel (0) target = $region17
    $region16: #{tpu_custom_call.1} parent=1 // pred_region
      _
    $region17: #{tpu_custom_call.1} parent=1 // pred_fallthru
      _
    // Predicated region
    $region18: #{tpu_custom_call.1} parent=1 // pred_check
      _
    $region19: #{tpu_custom_call.1} parent=1 // pred_check_branch
      %40 = sbr.rel (0) target = $region21
    $region20: #{tpu_custom_call.1} parent=1 // pred_region
      _
    $region21: #{tpu_custom_call.1} parent=1 // pred_fallthru
      _
    // Predicated region
    $region22: #{tpu_custom_call.1} parent=1 // pred_check
      _
    $region23: #{tpu_custom_call.1} parent=1 // pred_check_branch
      %42 = sbr.rel (0) target = $region25
    $region24: #{tpu_custom_call.1} parent=1 // pred_region
      %43 = dma.done [#allocation4], 128
    $region25: #{tpu_custom_call.1} parent=1 // pred_fallthru
      _
    // Predicated region
    $region26: #{tpu_custom_call.1} parent=1 // pred_check
      _
    $region27: #{tpu_custom_call.1} parent=1 // pred_check_branch
      %45 = sbr.rel (0) target = $region29
    $region28: #{tpu_custom_call.1} parent=1 // pred_region
      %46 = dma.done [#allocation6], 512
    $region29: #{tpu_custom_call.1} parent=1 // pred_fallthru
      _
    %v47 = vld [vmem:[#allocation3] sm:$0xff]
    %v48 = vld [vmem:[#allocation5] sm:$0xff]
    %v49 = vld [vmem:[#allocation5 + $0x8] sm:$0xff]
    %v50 = vld [vmem:[#allocation5 + $0x10] sm:$0xff]
    %v51 = vld [vmem:[#allocation5 + $0x18] sm:$0xff]
    %v52 = vld [vmem:[%s2] sm:$0x1]
    %v54 = vlaneseq
    %v55 = vshrl.u32 %v54, 7
    %v56 = vsub.s32 0, %v55
    %v57 = vrot.slane %v52, %v56
    %vm59 = vcmask 261120
    %v61 = vsel %vm59, %v47, 0
    %63 = vmatprep.subr.mxu0 0.0
    %64 = vmatpush1.msra.mxu0 0.0
    %65 = vmatprep.subr.mxu0 0.0
    %66 = vmatpush1.msra.mxu0 0.0
    %67 = vmatprep.subr.mxu0 0.0
    %68 = vmatpush1.msra.mxu0 0.0
    %69 = vmatprep.subr.mxu0 0.0
    %70 = vmatpush1.msra.mxu0 0.0
    %71 = vmatprep.subr.mxu0 0.0
    %72 = vmatpush1.msra.mxu0 0.0
    %73 = vmatprep.subr.mxu0 0.0
    %74 = vmatpush1.msra.mxu0 0.0
    %75 = vmatprep.subr.mxu0 0.0
    %76 = vmatpush1.msra.mxu0 0.0
    %77 = vmatprep.subr.mxu0 0.0
    %78 = vmatpush1.msra.mxu0 0.0
    %79 = vmatprep.subr.mxu0 0.0
    %80 = vmatpush1.msra.mxu0 0.0
    %81 = vmatprep.subr.mxu0 0.0
    %82 = vmatpush1.msra.mxu0 0.0
    %83 = vmatprep.subr.mxu0 0.0
    %84 = vmatpush1.msra.mxu0 0.0
    %85 = vmatprep.subr.mxu0 0.0
    %86 = vmatpush1.msra.mxu0 0.0
    %87 = vmatprep.subr.mxu0 0.0
    %88 = vmatpush1.msra.mxu0 %v51
    %89 = vmatprep.subr.mxu0 0.0
    %90 = vmatpush1.msra.mxu0 %v50
    %91 = vmatprep.subr.mxu0 0.0
    %92 = vmatpush1.msra.mxu0 %v49
    %93 = vmatprep.subr.mxu0 0.0
    %94 = vmatpush1.msra.mxu0 %v48
    %95 = vmatprep.subr.mxu0 0.0
    %96 = vmatpush2.msra.mxu0 0.0
    %97 = vmatprep.subr.mxu0 0.0
    %98 = vmatpush2.msra.mxu0 0.0
    %99 = vmatprep.subr.mxu0 0.0
    %100 = vmatpush2.msra.mxu0 0.0
    %101 = vmatprep.subr.mxu0 0.0
    %102 = vmatpush2.msra.mxu0 0.0
    %103 = vmatprep.subr.mxu0 0.0
    %104 = vmatpush2.msra.mxu0 0.0
    %105 = vmatprep.subr.mxu0 0.0
    %106 = vmatpush2.msra.mxu0 0.0
    %107 = vmatprep.subr.mxu0 0.0
    %108 = vmatpush2.msra.mxu0 0.0
    %109 = vmatprep.subr.mxu0 0.0
    %110 = vmatpush2.msra.mxu0 0.0
    %111 = vmatprep.subr.mxu0 0.0
    %112 = vmatpush2.msra.mxu0 0.0
    %113 = vmatprep.subr.mxu0 0.0
    %114 = vmatpush2.msra.mxu0 0.0
    %115 = vmatprep.subr.mxu0 0.0
    %116 = vmatpush2.msra.mxu0 0.0
    %117 = vmatprep.subr.mxu0 0.0
    %118 = vmatpush2.msra.mxu0 0.0
    %119 = vmatprep.subr.mxu0 0.0
    %120 = vmatpush2.msra.mxu0 0.0
    %121 = vmatprep.subr.mxu0 0.0
    %122 = vmatpush2.msra.mxu0 0.0
    %123 = vmatprep.subr.mxu0 0.0
    %124 = vmatpush2.msra.mxu0 0.0
    %125 = vmatprep.subr.mxu0 0.0
    %126 = vmatpush2.msra.mxu0 0.0
    %127 = vmatprep.mubr.f32.mxu0 0.0
    %128 = vmatmul.mubr.f32.gmra.mxu0 %v61
    %v129 = vpop.f32.mrf.mxu0
    %v130 = vadd.f32 %v57, %v129
    %v131 = vpop.f32.mrf.mxu0
    %132 = vdwg.mxu0
    %v133 = vtanh.pop %v130
    %v134 = vsub.f32 %v130, %v133
    %v135 = vld [vmem:[%s3] sm:$0x1]
    %v137 = vlaneseq
    %v138 = vshrl.u32 %v137, 7
    %v139 = vsub.s32 0, %v138
    %v140 = vrot.slane %v135, %v139
    %v142 = vmul.f32 %v134, %v140
    %v143 = vsel %vm59, %v142, 0.0
    %144 = vadd.xlane.f32.xlu0 %v143
    %v145 = vpop.xlane.xlu0 %144
    %s146 = sld [smem:[#allocation2]]
    %v147 = vstv %s146
    %v148 = vadd.f32 %v145, %v147
    %v149 = vmax.f32 %v148, -1000.0
    %v150 = vmin.f32 %v149, 1000.0
    %vm151 = vcmask 7168
    %152 = vst.msk [vmem:[%s5] sm:$0xff] %vm151, %v150
    // Predicated region
    $region30: #{tpu_custom_call.1} parent=1 // pred_check
      _
    $region31: #{tpu_custom_call.1} parent=1 // pred_check_branch
      %154 = sbr.rel (0) target = $region33
    $region32: #{tpu_custom_call.1} parent=1 // pred_region
      _
    $region33: #{tpu_custom_call.1} parent=1 // pred_fallthru
      _
    // Predicated region
    $region34: #{tpu_custom_call.1} parent=1 // pred_check
      _
    $region35: #{tpu_custom_call.1} parent=1 // pred_check_branch
      %156 = sbr.rel (0) target = $region37
    $region36: #{tpu_custom_call.1} parent=1 // pred_region
      _
    $region37: #{tpu_custom_call.1} parent=1 // pred_fallthru
      _
    %157 = vsyncpa [#allocation4], 1
    %158 = vsyncpa [#allocation6], 1

</llo_original>
